<compile_context>
chip_gen: v5e
topology: v5e:2x2
jax: 0.10.0
libtpu: 0.0.40
codegen_flags: <defaults>
</compile_context>

<pallas_src>
import math
import functools

import jax
import jax.numpy as jnp
from jax.experimental import pallas as pl
from jax.experimental.pallas import tpu as pltpu

SUBLANE = 8


def _round_up(v, m):
    return ((v + m - 1) // m) * m


def _mlp_kernel(*refs, n_hidden, negative_slope):
    """Fused MLP.

    refs = (x_ref, [hidden_w_ref, hidden_b_ref,] final_w_ref, final_b_ref, out_ref)
      hidden_w_ref : [n_hidden, L, L]  bf16   (pre-transposed to [in, out])
      hidden_b_ref : [n_hidden, 1, L]  f32
      final_w_ref  : [L, E]            bf16
      final_b_ref  : [1, E]            f32
    Each layer: h = h @ W + b, LeakyReLU(negative_slope) on all but the last layer.
    Accumulation is f32 (preferred_element_type); everything stays in VMEM/vregs.
    """
    if n_hidden > 0:
        x_ref, hw_ref, hb_ref, fw_ref, fb_ref, o_ref = refs
    else:
        x_ref, fw_ref, fb_ref, o_ref = refs

    h = x_ref[...]                                       # [tile_b, L] f32
    for i in range(n_hidden):                            # static, unrolled
        w = hw_ref[i]                                    # [L, L] bf16
        b = hb_ref[i]                                    # [1, L] f32
        h = jnp.dot(h.astype(w.dtype), w, preferred_element_type=jnp.float32) + b
        h = jnp.where(h >= 0, h, negative_slope * h)
    w = fw_ref[...]                                      # [L, E] bf16
    b = fb_ref[...]                                      # [1, E] f32
    h = jnp.dot(h.astype(w.dtype), w, preferred_element_type=jnp.float32) + b
    o_ref[...] = h.astype(o_ref.dtype)


def init_embedding_params(key, number, latent_dim, embedding_dim):
    """Deterministic init matching nn.Linear default U(-1/sqrt(fan_in), 1/sqrt(fan_in)).

    Weights kept in PyTorch layout [out, in]; transposition / packing / dtype cast
    happens once in `prepare_embedding_params`.
    """
    params = []
    dims = [(latent_dim, latent_dim)] * number + [(latent_dim, embedding_dim)]
    for (d_in, d_out) in dims:
        key, kw, kb = jax.random.split(key, 3)
        bound = 1.0 / math.sqrt(d_in)
        w = jax.random.uniform(kw, (d_out, d_in), jnp.float32, -bound, bound)
        b = jax.random.uniform(kb, (d_out,), jnp.float32, -bound, bound)
        params.append((w, b))
    return params


def prepare_embedding_params(params, compute_dtype=jnp.bfloat16):
    """One-time prep: transpose to [in, out], cast weights to bf16, pack the hidden
    layers into single arrays, reshape biases to (1, D_out) f32."""
    n_hidden = len(params) - 1
    prepared = {"n_hidden": n_hidden}
    if n_hidden > 0:
        prepared["hidden_w"] = jnp.stack(
            [w.T for (w, _) in params[:-1]]).astype(compute_dtype)          # [n_hidden, L, L]
        prepared["hidden_b"] = jnp.stack(
            [b.reshape(1, -1) for (_, b) in params[:-1]]).astype(jnp.float32)  # [n_hidden, 1, L]
    w_f, b_f = params[-1]
    prepared["final_w"] = jnp.asarray(w_f.T, compute_dtype)                 # [L, E]
    prepared["final_b"] = jnp.asarray(b_f.reshape(1, -1), jnp.float32)      # [1, E]
    return prepared


def embedding_forward(x, prepared, latent_dim, embedding_dim,
                      negative_slope=0.2, tile_b=512):
    """x: [B, latent_dim] f32 -> [B, embedding_dim] f32 via one fused Pallas kernel."""
    B, d_in = x.shape
    assert d_in == latent_dim
    n_hidden = prepared["n_hidden"]

    # Big tile (amortize ~0.35us/step overhead) but keep >=2 grid steps when B allows,
    # so v7x's second TensorCore is not idle; always sublane-aligned.
    tile_b = min(tile_b, max(SUBLANE, _round_up(pl.cdiv(B, 2), SUBLANE)))
    grid = (pl.cdiv(B, tile_b),)

    inputs = [x]
    # Block last dims equal the full array dims -> no 128-lane zero-padding needed.
    in_specs = [pl.BlockSpec((tile_b, latent_dim), lambda i: (i, 0))]
    if n_hidden > 0:
        hw, hb = prepared["hidden_w"], prepared["hidden_b"]
        inputs += [hw, hb]
        in_specs += [pl.BlockSpec(hw.shape, lambda i: (0, 0, 0)),   # weights stay resident
                     pl.BlockSpec(hb.shape, lambda i: (0, 0, 0))]
    fw, fb = prepared["final_w"], prepared["final_b"]
    inputs += [fw, fb]
    in_specs += [pl.BlockSpec(fw.shape, lambda i: (0, 0)),
                 pl.BlockSpec(fb.shape, lambda i: (0, 0))]

    out_specs = pl.BlockSpec((tile_b, embedding_dim), lambda i: (i, 0))

    # Advisory cost hint for XLA's scheduler (real flops / real bytes).
    flops = 2 * B * (n_hidden * latent_dim * latent_dim + latent_dim * embedding_dim)
    bytes_accessed = (x.size * x.dtype.itemsize
                      + sum(int(a.size) * a.dtype.itemsize for a in inputs[1:])
                      + B * embedding_dim * 4)

    kernel = functools.partial(_mlp_kernel, n_hidden=n_hidden,
                               negative_slope=negative_slope)
    return pl.pallas_call(
        kernel,
        grid=grid,
        in_specs=in_specs,
        out_specs=out_specs,
        out_shape=jax.ShapeDtypeStruct((B, embedding_dim), jnp.float32),
        compiler_params=pltpu.CompilerParams(
            dimension_semantics=("parallel",),      # megacore sharding on v7x
        ),
        cost_estimate=pl.CostEstimate(flops=flops, transcendentals=0,
                                      bytes_accessed=bytes_accessed),
    )(*inputs)


if __name__ == "__main__":
    # Small shapes consistent with the module.
    number = 2
    latent_dim = 32
    embedding_dim = 16
    batch = 8

    key = jax.random.PRNGKey(0)
    key, kx = jax.random.split(key)
    x = jax.random.normal(kx, (batch, latent_dim), jnp.float32)

    params = init_embedding_params(key, number, latent_dim, embedding_dim)
    prepared = prepare_embedding_params(params)

    out = embedding_forward(x, prepared, latent_dim, embedding_dim)
    out = jax.block_until_ready(out)
    assert out.shape == (batch, embedding_dim), out.shape

    # Pure-JAX f32 reference (PyTorch-layout weights). bf16 weights/activations inside
    # the kernel loosen the tolerance slightly vs. the old pure-f32 kernel.
    h = x
    for i, (w, b) in enumerate(params):
        h = h @ w.T + b
        if i != len(params) - 1:
            h = jnp.where(h >= 0, h, 0.2 * h)
    assert jnp.allclose(out, h, atol=2e-2, rtol=2e-2), float(jnp.max(jnp.abs(out - h)))

    print("KERNEL_OK")
</pallas_src>

<mosaic_0001>
module attributes {stable_mosaic.version = 11 : i64} {
  func.func @_mlp_kernel(%arg0: i32, %arg1: memref<8x32xf32, #tpu.memory_space<vmem>>, %arg2: memref<2x32x32xbf16, #tpu.memory_space<vmem>>, %arg3: memref<2x1x32xf32, #tpu.memory_space<vmem>>, %arg4: memref<32x16xbf16, #tpu.memory_space<vmem>>, %arg5: memref<1x16xf32, #tpu.memory_space<vmem>>, %arg6: memref<8x16xf32, #tpu.memory_space<vmem>>) attributes {dimension_semantics = [#tpu.dimension_semantics<parallel>], iteration_bounds = array<i64: 1>, scalar_prefetch = 0 : i64, scratch_operands = 0 : i64, tpu.core_type = #tpu.core_type<tc>, window_params = [{transform_indices = @transform_0, window_bounds = array<i64: 8, 32>}, {pipeline_mode = #tpu.pipeline_mode<synchronous>, transform_indices = @transform_1, window_bounds = array<i64: 2, 32, 32>}, {pipeline_mode = #tpu.pipeline_mode<synchronous>, transform_indices = @transform_2, window_bounds = array<i64: 2, 1, 32>}, {pipeline_mode = #tpu.pipeline_mode<synchronous>, transform_indices = @transform_3, window_bounds = array<i64: 32, 16>}, {pipeline_mode = #tpu.pipeline_mode<synchronous>, transform_indices = @transform_4, window_bounds = array<i64: 1, 16>}, {transform_indices = @transform_5, window_bounds = array<i64: 8, 16>}]} {
    %c0 = arith.constant 0 : index
    %c0_0 = arith.constant 0 : index
    %0 = vector.load %arg1[%c0, %c0_0] : memref<8x32xf32, #tpu.memory_space<vmem>>, vector<8x32xf32>
    %c0_1 = arith.constant 0 : index
    %c0_2 = arith.constant 0 : index
    %c0_3 = arith.constant 0 : index
    %1 = vector.load %arg2[%c0_1, %c0_2, %c0_3] : memref<2x32x32xbf16, #tpu.memory_space<vmem>>, vector<1x32x32xbf16>
    %2 = vector.shape_cast %1 : vector<1x32x32xbf16> to vector<32x32xbf16>
    %c0_4 = arith.constant 0 : index
    %c0_5 = arith.constant 0 : index
    %c0_6 = arith.constant 0 : index
    %3 = vector.load %arg3[%c0_4, %c0_5, %c0_6] : memref<2x1x32xf32, #tpu.memory_space<vmem>>, vector<1x1x32xf32>
    %4 = vector.shape_cast %3 : vector<1x1x32xf32> to vector<1x32xf32>
    %5 = arith.truncf %0 : vector<8x32xf32> to vector<8x32xbf16>
    %cst = arith.constant dense<0.000000e+00> : vector<8x32xf32>
    %6 = tpu.matmul %5, %2, %cst {dimension_numbers = #tpu.dot_dimension_numbers<[1], [0], [0], [1], [0, 0, 1, 1], [], []>} : vector<8x32xbf16>, vector<32x32xbf16>, vector<8x32xf32> -> vector<8x32xf32>
    %7 = vector.broadcast %4 : vector<1x32xf32> to vector<8x32xf32>
    %8 = arith.addf %6, %7 : vector<8x32xf32>
    %cst_7 = arith.constant 0.000000e+00 : f32
    %9 = vector.broadcast %cst_7 : f32 to vector<8x32xf32>
    %10 = arith.cmpf oge, %8, %9 : vector<8x32xf32>
    %cst_8 = arith.constant 2.000000e-01 : f32
    %11 = vector.broadcast %cst_8 : f32 to vector<8x32xf32>
    %12 = arith.mulf %11, %8 : vector<8x32xf32>
    %13 = arith.select %10, %8, %12 : vector<8x32xi1>, vector<8x32xf32>
    %c1 = arith.constant 1 : index
    %c0_9 = arith.constant 0 : index
    %c0_10 = arith.constant 0 : index
    %14 = vector.load %arg2[%c1, %c0_9, %c0_10] : memref<2x32x32xbf16, #tpu.memory_space<vmem>>, vector<1x32x32xbf16>
    %15 = vector.shape_cast %14 : vector<1x32x32xbf16> to vector<32x32xbf16>
    %c1_11 = arith.constant 1 : index
    %c0_12 = arith.constant 0 : index
    %c0_13 = arith.constant 0 : index
    %16 = vector.load %arg3[%c1_11, %c0_12, %c0_13] : memref<2x1x32xf32, #tpu.memory_space<vmem>>, vector<1x1x32xf32>
    %17 = vector.shape_cast %16 : vector<1x1x32xf32> to vector<1x32xf32>
    %18 = arith.truncf %13 : vector<8x32xf32> to vector<8x32xbf16>
    %cst_14 = arith.constant dense<0.000000e+00> : vector<8x32xf32>
    %19 = tpu.matmul %18, %15, %cst_14 {dimension_numbers = #tpu.dot_dimension_numbers<[1], [0], [0], [1], [0, 0, 1, 1], [], []>} : vector<8x32xbf16>, vector<32x32xbf16>, vector<8x32xf32> -> vector<8x32xf32>
    %20 = vector.broadcast %17 : vector<1x32xf32> to vector<8x32xf32>
    %21 = arith.addf %19, %20 : vector<8x32xf32>
    %cst_15 = arith.constant 0.000000e+00 : f32
    %22 = vector.broadcast %cst_15 : f32 to vector<8x32xf32>
    %23 = arith.cmpf oge, %21, %22 : vector<8x32xf32>
    %cst_16 = arith.constant 2.000000e-01 : f32
    %24 = vector.broadcast %cst_16 : f32 to vector<8x32xf32>
    %25 = arith.mulf %24, %21 : vector<8x32xf32>
    %26 = arith.select %23, %21, %25 : vector<8x32xi1>, vector<8x32xf32>
    %c0_17 = arith.constant 0 : index
    %c0_18 = arith.constant 0 : index
    %27 = vector.load %arg4[%c0_17, %c0_18] : memref<32x16xbf16, #tpu.memory_space<vmem>>, vector<32x16xbf16>
    %c0_19 = arith.constant 0 : index
    %c0_20 = arith.constant 0 : index
    %28 = vector.load %arg5[%c0_19, %c0_20] : memref<1x16xf32, #tpu.memory_space<vmem>>, vector<1x16xf32>
    %29 = arith.truncf %26 : vector<8x32xf32> to vector<8x32xbf16>
    %cst_21 = arith.constant dense<0.000000e+00> : vector<8x16xf32>
    %30 = tpu.matmul %29, %27, %cst_21 {dimension_numbers = #tpu.dot_dimension_numbers<[1], [0], [0], [1], [0, 0, 1, 1], [], []>} : vector<8x32xbf16>, vector<32x16xbf16>, vector<8x16xf32> -> vector<8x16xf32>
    %31 = vector.broadcast %28 : vector<1x16xf32> to vector<8x16xf32>
    %32 = arith.addf %30, %31 : vector<8x16xf32>
    %c0_22 = arith.constant 0 : index
    %c0_23 = arith.constant 0 : index
    %33 = vector.load %arg6[%c0_22, %c0_23] : memref<8x16xf32, #tpu.memory_space<vmem>>, vector<8x16xf32>
    tpu.vector_store %arg6[%c0_22, %c0_23], %32 {strides = array<i32>} : memref<8x16xf32, #tpu.memory_space<vmem>>, vector<8x16xf32>,
    return
  }
  func.func @transform_0(%arg0: i32) -> (i32, i32) {
    %c0_i32 = arith.constant 0 : i32
    %c0_i32_0 = arith.constant 0 : i32
    return %arg0, %c0_i32 : i32, i32
  }
  func.func @transform_1(%arg0: i32) -> (i32, i32, i32) {
    %c0_i32 = arith.constant 0 : i32
    %c0_i32_0 = arith.constant 0 : i32
    %c0_i32_1 = arith.constant 0 : i32
    %c0_i32_2 = arith.constant 0 : i32
    return %c0_i32, %c0_i32_0, %c0_i32_1 : i32, i32, i32
  }
  func.func @transform_2(%arg0: i32) -> (i32, i32, i32) {
    %c0_i32 = arith.constant 0 : i32
    %c0_i32_0 = arith.constant 0 : i32
    %c0_i32_1 = arith.constant 0 : i32
    %c0_i32_2 = arith.constant 0 : i32
    return %c0_i32, %c0_i32_0, %c0_i32_1 : i32, i32, i32
  }
  func.func @transform_3(%arg0: i32) -> (i32, i32) {
    %c0_i32 = arith.constant 0 : i32
    %c0_i32_0 = arith.constant 0 : i32
    %c0_i32_1 = arith.constant 0 : i32
    return %c0_i32, %c0_i32_0 : i32, i32
  }
  func.func @transform_4(%arg0: i32) -> (i32, i32) {
    %c0_i32 = arith.constant 0 : i32
    %c0_i32_0 = arith.constant 0 : i32
    %c0_i32_1 = arith.constant 0 : i32
    return %c0_i32, %c0_i32_0 : i32, i32
  }
  func.func @transform_5(%arg0: i32) -> (i32, i32) {
    %c0_i32 = arith.constant 0 : i32
    %c0_i32_0 = arith.constant 0 : i32
    return %arg0, %c0_i32 : i32, i32
  }
}

</mosaic_0001>

<llo_original>
// kernel: tpu_custom_call.1
$region0: #{tpu_custom_call.1}
  #allocation0 [shape = 'u32[]', space=smem, size = 0x4, offset = 0x4, fixed_abs, tag = 'smem constant byte address 0x4 - core index']
  #allocation1 [shape = 'u32[72,128]{1,0:T(1,128)}', space=vmem, size = 0x9000, scoped, tag = 'internal scratch']
  %s0 = inlined_call_operand.vmem [shape: f32[8,32], index: 0, kind: input, shape index: {}]
  %s1 = inlined_call_operand.hbm [shape: bf16[2,32,32], index: 1, kind: input, shape index: {}]
  %s2 = inlined_call_operand.vmem [shape: f32[2,1,32], index: 2, kind: input, shape index: {}]
  %s3 = inlined_call_operand.vmem [shape: bf16[32,16], index: 3, kind: input, shape index: {}]
  %s4 = inlined_call_operand.vmem [shape: f32[1,16], index: 4, kind: input, shape index: {}]
  %s5 = inlined_call_operand.hbm [shape: f32[8,16], index: 5, kind: output, shape index: {}]
  %s6 = sld [smem:[#allocation0]]
  $region34: #{tpu_custom_call.1} parent=0
    _
  %s8 = ssub.s32 1, %s6
  %s9 = scalar_select 0, %s8, %s6
  $region1: #{tpu_custom_call.1} parent=0
    #allocation2 [shape = 'u8[16384]{0}', space=vmem, size = 0x4000, scoped, tag = 'input window, operand 1, single buffered']
    #allocation3 [shape = 's32[1]{0}', space=sflag, size = 0x4, scoped, tag = 'scoped memory for tpu_custom_call.1']
    #allocation4 [shape = 's32[1]{0}', space=sflag, size = 0x4, scoped, tag = 'scoped memory for tpu_custom_call.1']
    #allocation5 [shape = 'u8[4096]{0}', space=vmem, size = 0x1000, scoped, tag = 'output window, operand 0, single buffered']
    %10 = vsyncpa [#allocation3], 0
    %11 = vsyncpa [#allocation4], 0
    // Predicated region
    $region2: #{tpu_custom_call.1} parent=1 // pred_check
      _
    $region3: #{tpu_custom_call.1} parent=1 // pred_check_branch
      %13 = sbr.rel (0) target = $region5
    $region4: #{tpu_custom_call.1} parent=1 // pred_region
      _
    $region5: #{tpu_custom_call.1} parent=1 // pred_fallthru
      _
    // Predicated region
    $region6: #{tpu_custom_call.1} parent=1 // pred_check
      _
    $region7: #{tpu_custom_call.1} parent=1 // pred_check_branch
      %15 = sbr.rel (0) target = $region9
    $region8: #{tpu_custom_call.1} parent=1 // pred_region
      %17 = vsyncadd [#allocation3], 0
      %s18 = sshll.u32 %s1, 4
      %s19 = int_to_ptr.hbm [resolvable:$true] %s18
      %s20 = sshll.u32 [#allocation2], 4
      %s21 = int_to_ptr.vmem [resolvable:$true] %s20
      %26 = dma.hbm_to_vmem [thread:$0]  %s19, 512, %s21, [#allocation3], 64, 64, 4
    $region9: #{tpu_custom_call.1} parent=1 // pred_fallthru
      _
    // Predicated region
    $region10: #{tpu_custom_call.1} parent=1 // pred_check
      _
    $region11: #{tpu_custom_call.1} parent=1 // pred_check_branch
      %28 = sbr.rel (0) target = $region13
    $region12: #{tpu_custom_call.1} parent=1 // pred_region
      _
    $region13: #{tpu_custom_call.1} parent=1 // pred_fallthru
      _
    // Predicated region
    $region14: #{tpu_custom_call.1} parent=1 // pred_check
      _
    $region15: #{tpu_custom_call.1} parent=1 // pred_check_branch
      %30 = sbr.rel (0) target = $region17
    $region16: #{tpu_custom_call.1} parent=1 // pred_region
      _
    $region17: #{tpu_custom_call.1} parent=1 // pred_fallthru
      _
    // Predicated region
    $region18: #{tpu_custom_call.1} parent=1 // pred_check
      _
    $region19: #{tpu_custom_call.1} parent=1 // pred_check_branch
      %32 = sbr.rel (0) target = $region21
    $region20: #{tpu_custom_call.1} parent=1 // pred_region
      _
    $region21: #{tpu_custom_call.1} parent=1 // pred_fallthru
      _
    // Predicated region
    $region22: #{tpu_custom_call.1} parent=1 // pred_check
      _
    $region23: #{tpu_custom_call.1} parent=1 // pred_check_branch
      %34 = sbr.rel (0) target = $region25
    $region24: #{tpu_custom_call.1} parent=1 // pred_region
      %36 = dma.done [#allocation3], 512
    $region25: #{tpu_custom_call.1} parent=1 // pred_fallthru
      _
    %v38 = vld [vmem:[%s0] sm:$0xff]
    %v39 = vld [vmem:[#allocation2] sm:$0xf]
    %v40 = vld [vmem:[#allocation2 + $0x4] sm:$0xf]
    %v41 = vld [vmem:[#allocation2 + $0x8] sm:$0xf]
    %v42 = vld [vmem:[#allocation2 + $0xc] sm:$0xf]
    %v43 = vld [vmem:[%s2] sm:$0x1]
    %v44 = vpack.c.bf16 %v38, %v38
    %v46 = vperm.slane %v43, 0
    %v52 = vunpack.c.l.b16 %v39
    %v53 = vunpack.c.l.b16 %v40
    %v54 = vunpack.c.l.b16 %v41
    %v55 = vunpack.c.l.b16 %v42
    %v56 = vpack.c.b16 %v53, %v52
    %v57 = vpack.c.b16 %v55, %v54
    %vm60 = vcmask 261120
    %v62 = vsel %vm60, %v44, 0
    %64 = vmatpush.bf16.msra.mxu0 0
    %65 = vmatpush.bf16.msra.mxu0 0
    %66 = vmatpush.bf16.msra.mxu0 0
    %67 = vmatpush.bf16.msra.mxu0 0
    %68 = vmatpush.bf16.msra.mxu0 0
    %69 = vmatpush.bf16.msra.mxu0 0
    %70 = vmatpush.bf16.msra.mxu0 %v57
    %71 = vmatpush.bf16.msra.mxu0 %v56
    %72 = vmatmul.bf16.gmra.mxu0 %v62
    %v73 = vpop.f32.mrf.mxu0
    %v74 = vadd.f32 %v46, %v73
    %v75 = vpop.f32.mrf.mxu0
    %76 = vdwg.mxu0
    %vm77 = vcmp.ge.f32.partialorder %v74, 0.0
    %v78 = vmul.f32 %v74, 0.2
    %v79 = vsel %vm77, %v74, %v78
    %s80 = scalar_lea.vmem [#allocation2], 16
    %v81 = vld [vmem:[%s80] sm:$0xf]
    %v82 = vld [vmem:[%s80 + $0x4] sm:$0xf]
    %v83 = vld [vmem:[%s80 + $0x8] sm:$0xf]
    %v84 = vld [vmem:[%s80 + $0xc] sm:$0xf]
    %s85 = scalar_lea.vmem %s2, 1
    %v86 = vld [vmem:[%s85] sm:$0x1]
    %v87 = vpack.c.bf16 %v79, %v79
    %v89 = vperm.slane %v86, 0
    %v95 = vunpack.c.l.b16 %v81
    %v96 = vunpack.c.l.b16 %v82
    %v97 = vunpack.c.l.b16 %v83
    %v98 = vunpack.c.l.b16 %v84
    %v99 = vpack.c.b16 %v96, %v95
    %v100 = vpack.c.b16 %v98, %v97
    %v104 = vsel %vm60, %v87, 0
    %106 = vmatpush.bf16.msra.mxu0 0
    %107 = vmatpush.bf16.msra.mxu0 0
    %108 = vmatpush.bf16.msra.mxu0 0
    %109 = vmatpush.bf16.msra.mxu0 0
    %110 = vmatpush.bf16.msra.mxu0 0
    %111 = vmatpush.bf16.msra.mxu0 0
    %112 = vmatpush.bf16.msra.mxu0 %v100
    %113 = vmatpush.bf16.msra.mxu0 %v99
    %114 = vmatmul.bf16.gmra.mxu0 %v104
    %v115 = vpop.f32.mrf.mxu0
    %v116 = vadd.f32 %v89, %v115
    %v117 = vpop.f32.mrf.mxu0
    %118 = vdwg.mxu0
    %vm119 = vcmp.ge.f32.partialorder %v116, 0.0
    %v120 = vmul.f32 %v116, 0.2
    %v121 = vsel %vm119, %v116, %v120
    %v122 = vld [vmem:[%s3] sm:$0xf]
    %v123 = vld [vmem:[%s3 + $0x4] sm:$0xf]
    %v124 = vld [vmem:[%s3 + $0x8] sm:$0xf]
    %v125 = vld [vmem:[%s3 + $0xc] sm:$0xf]
    %v126 = vld [vmem:[%s4] sm:$0x1]
    %v127 = vpack.c.bf16 %v121, %v121
    %v129 = vperm.slane %v126, 0
    %v135 = vunpack.c.l.b16 %v122
    %v136 = vunpack.c.l.b16 %v123
    %v137 = vunpack.c.l.b16 %v124
    %v138 = vunpack.c.l.b16 %v125
    %v139 = vpack.c.b16 %v136, %v135
    %v140 = vpack.c.b16 %v138, %v137
    %v144 = vsel %vm60, %v127, 0
    %146 = vmatpush.bf16.msra.mxu0 0
    %147 = vmatpush.bf16.msra.mxu0 0
    %148 = vmatpush.bf16.msra.mxu0 0
    %149 = vmatpush.bf16.msra.mxu0 0
    %150 = vmatpush.bf16.msra.mxu0 0
    %151 = vmatpush.bf16.msra.mxu0 0
    %152 = vmatpush.bf16.msra.mxu0 %v140
    %153 = vmatpush.bf16.msra.mxu0 %v139
    %154 = vmatmul.bf16.gmra.mxu0 %v144
    %v155 = vpop.f32.mrf.mxu0
    %v156 = vadd.f32 %v129, %v155
    %v157 = vpop.f32.mrf.mxu0
    %158 = vdwg.mxu0
    %vm159 = vcmask 130048
    %160 = vst.msk [vmem:[#allocation5] sm:$0xff] %vm159, %v156
    // Predicated region
    $region26: #{tpu_custom_call.1} parent=1 // pred_check
      _
    $region27: #{tpu_custom_call.1} parent=1 // pred_check_branch
      %162 = sbr.rel (0) target = $region29
    $region28: #{tpu_custom_call.1} parent=1 // pred_region
      %164 = vsyncadd [#allocation4], 0
      %s166 = sshll.u32 [#allocation5], 4
      %s167 = int_to_ptr.vmem [resolvable:$true] %s166
      %s168 = sshll.u32 %s5, 4
      %s169 = int_to_ptr.hbm [resolvable:$true] %s168
      %171 = dma.vmem_to_hbm [thread:$0]  %s167, 128, %s169, [#allocation4]
    $region29: #{tpu_custom_call.1} parent=1 // pred_fallthru
      _
    // Predicated region
    $region30: #{tpu_custom_call.1} parent=1 // pred_check
      _
    $region31: #{tpu_custom_call.1} parent=1 // pred_check_branch
      %173 = sbr.rel (0) target = $region33
    $region32: #{tpu_custom_call.1} parent=1 // pred_region
      %175 = dma.done [#allocation4], 128
    $region33: #{tpu_custom_call.1} parent=1 // pred_fallthru
      _
    %176 = vsyncpa [#allocation3], 1
    %177 = vsyncpa [#allocation4], 1

</llo_original>
